<compile_context>
chip_gen: v7x
topology: tpu7x:2x2x1
jax: 0.10.0
libtpu: 0.0.40
codegen_flags: <defaults>
</compile_context>

<pallas_src>
import jax
import jax.numpy as jnp
from jax.experimental import pallas as pl
from jax.experimental.pallas import tpu as pltpu


def _actnorm_kernel(scale_ref, shift_ref, x_ref, y_ref):
    # scale_ref / shift_ref : (TR, 1)   f32 per-row (= per batch*channel) affine params
    # x_ref / y_ref         : (TR, THW) lane-dense tile of the fused (B*C, H*W) view
    x = x_ref[...].astype(jnp.float32)
    y_ref[...] = (x * scale_ref[...] + shift_ref[...]).astype(y_ref.dtype)


def _pick_tile(extent, unit, max_elems):
    """Tile size for one axis: the full extent if it fits `max_elems` (always a
    legal block size), otherwise the largest multiple of `unit` <= max_elems.
    Partial last blocks are handled by pl.cdiv grids."""
    if extent <= max_elems:
        return int(extent)
    return int(max(unit, (max_elems // unit) * unit))


def actnorm_forward(x, weight, bias, logpx=None, block_budget_bytes=4 << 20):
    """ActNorm2d forward.

    x: (B, C, H, W) (f32 or bf16); weight/bias: (C,); logpx: (B, 1) or None.
    Returns y (same dtype as x) and optionally (y, logpx - logdet).
    """
    B, C, H, W = x.shape
    HW = H * W
    R = B * C

    itemsize = jnp.dtype(x.dtype).itemsize
    sub_unit = {4: 8, 2: 16, 1: 32}.get(itemsize, 8)   # sublane packing unit per dtype
    lane_unit = 128

    # Hoisted, data-independent parameter math (one tiny XLA op, not per grid step):
    #   y = (x + bias) * exp(weight)  ==  x * scale + shift
    scale = jnp.exp(weight.astype(jnp.float32))                 # (C,)
    shift = bias.astype(jnp.float32) * scale                    # (C,)
    # Fold batch into the sublane axis; row r = b*C + c -> channel r % C.
    scale_rows = jnp.tile(scale, B).reshape(R, 1)               # (B*C, 1) f32
    shift_rows = jnp.tile(shift, B).reshape(R, 1)               # (B*C, 1) f32

    # Contiguous, layout-free reshape; NO dtype cast (keep HBM traffic in x.dtype).
    x2 = x.reshape(R, HW)

    # Tile selection: grow the lane axis first (lane-dense output = widest lever),
    # then fill the remaining block budget with rows.
    max_lanes = max(lane_unit, block_budget_bytes // (sub_unit * itemsize))
    THW = _pick_tile(HW, lane_unit, max_lanes)
    max_rows = max(sub_unit, block_budget_bytes // (THW * itemsize))
    TR = _pick_tile(R, sub_unit, max_rows)

    grid = (pl.cdiv(R, TR), pl.cdiv(HW, THW))

    # Explicit scoped-VMEM budget: x and y double-buffered + param blocks + headroom.
    block_bytes = TR * THW * itemsize
    param_bytes = 2 * 2 * TR * lane_unit * 4        # (TR,1) pads to 128 lanes, 2 bufs each
    vmem_limit = max(16 << 20, min(32 << 20, 4 * block_bytes + param_bytes + (2 << 20)))

    grid_spec = pltpu.PrefetchScalarGridSpec(
        num_scalar_prefetch=0,
        grid=grid,
        in_specs=[
            pl.BlockSpec((TR, 1), lambda r, s: (r, 0)),        # scale: resident across spatial steps
            pl.BlockSpec((TR, 1), lambda r, s: (r, 0)),        # shift: resident across spatial steps
            pl.BlockSpec((TR, THW), lambda r, s: (r, s)),      # x tile
        ],
        out_specs=pl.BlockSpec((TR, THW), lambda r, s: (r, s)),  # y tile (lane-dense)
    )

    y2 = pl.pallas_call(
        _actnorm_kernel,
        out_shape=jax.ShapeDtypeStruct((R, HW), x.dtype),
        grid_spec=grid_spec,
        compiler_params=pltpu.CompilerParams(
            dimension_semantics=("parallel", "parallel"),
            vmem_limit_bytes=int(vmem_limit),
        ),
    )(scale_rows, shift_rows, x2)

    y = y2.reshape(B, C, H, W)

    if logpx is None:
        return y
    # _logdetgrad: weight broadcast over (C, H, W) per sample then summed
    # == H*W * sum(weight). Fully data-independent.
    logdet = jnp.float32(HW) * jnp.sum(weight.astype(jnp.float32))
    return y, logpx.astype(jnp.float32) - logdet


def actnorm_init_params(x, eps=1e-12):
    """Data-dependent init exactly as in the PyTorch forward (first call)."""
    B, C, H, W = x.shape
    x_t = jnp.transpose(x, (1, 0, 2, 3)).reshape(C, -1).astype(jnp.float32)
    batch_mean = jnp.mean(x_t, axis=1)
    batch_var = jnp.var(x_t, axis=1, ddof=1)                    # torch.var is unbiased
    batch_var = jnp.maximum(batch_var, 0.2)
    bias = -batch_mean
    weight = -0.5 * jnp.log(batch_var)
    return weight.astype(jnp.float32), bias.astype(jnp.float32)


if __name__ == "__main__":
    key = jax.random.PRNGKey(0)
    kx, kp = jax.random.split(key)
    B, C, H, W = 2, 4, 16, 16
    x = jax.random.normal(kx, (B, C, H, W), dtype=jnp.float32) * 2.0 + 0.5
    logpx = jax.random.normal(kp, (B, 1), dtype=jnp.float32)

    # forward on an uninitialized ActNormNd: data-dependent param init, then transform
    weight, bias = actnorm_init_params(x)

    y, logpx_out = actnorm_forward(x, weight, bias, logpx)
    y = jax.block_until_ready(y)
    logpx_out = jax.block_until_ready(logpx_out)

    # reference (plain JAX) check of the Pallas hot path + logpx path
    y_ref = (x + bias.reshape(1, C, 1, 1)) * jnp.exp(weight.reshape(1, C, 1, 1))
    logdet_ref = jnp.sum(
        jnp.broadcast_to(weight.reshape(1, C, 1, 1), x.shape).reshape(B, -1),
        axis=1, keepdims=True,
    )
    lp_ref = logpx - logdet_ref

    assert y.dtype == x.dtype
    assert jnp.allclose(y, y_ref, atol=1e-5, rtol=1e-5)
    assert jnp.allclose(logpx_out, lp_ref, atol=1e-4, rtol=1e-5)

    # bf16 smoke test: dtype preserved end-to-end, f32 compute inside the kernel.
    x_bf16 = x.astype(jnp.bfloat16)
    y_bf16 = jax.block_until_ready(actnorm_forward(x_bf16, weight, bias))
    assert y_bf16.dtype == jnp.bfloat16
    assert jnp.allclose(y_bf16.astype(jnp.float32), y_ref, atol=8e-2, rtol=8e-2)

    print("KERNEL_OK")
</pallas_src>

<mosaic_0001>
module attributes {stable_mosaic.version = 11 : i64} {
  func.func @_actnorm_kernel(%arg0: i32, %arg1: i32, %arg2: memref<8x1xf32, #tpu.memory_space<vmem>>, %arg3: memref<8x1xf32, #tpu.memory_space<vmem>>, %arg4: memref<8x256xf32, #tpu.memory_space<vmem>>, %arg5: memref<8x256xf32, #tpu.memory_space<vmem>>) attributes {dimension_semantics = [#tpu.dimension_semantics<parallel>, #tpu.dimension_semantics<parallel>], iteration_bounds = array<i64: 1, 1>, scalar_prefetch = 0 : i64, scratch_operands = 0 : i64, tpu.core_type = #tpu.core_type<tc>, window_params = [{transform_indices = @transform_0, window_bounds = array<i64: 8, 1>}, {transform_indices = @transform_1, window_bounds = array<i64: 8, 1>}, {transform_indices = @transform_2, window_bounds = array<i64: 8, 256>}, {transform_indices = @transform_3, window_bounds = array<i64: 8, 256>}]} {
    %c0 = arith.constant 0 : index
    %c0_0 = arith.constant 0 : index
    %0 = vector.load %arg4[%c0, %c0_0] : memref<8x256xf32, #tpu.memory_space<vmem>>, vector<8x256xf32>
    %c0_1 = arith.constant 0 : index
    %c0_2 = arith.constant 0 : index
    %1 = vector.load %arg2[%c0_1, %c0_2] : memref<8x1xf32, #tpu.memory_space<vmem>>, vector<8x1xf32>
    %2 = vector.broadcast %1 : vector<8x1xf32> to vector<8x256xf32>
    %3 = arith.mulf %0, %2 : vector<8x256xf32>
    %c0_3 = arith.constant 0 : index
    %c0_4 = arith.constant 0 : index
    %4 = vector.load %arg3[%c0_3, %c0_4] : memref<8x1xf32, #tpu.memory_space<vmem>>, vector<8x1xf32>
    %5 = vector.broadcast %4 : vector<8x1xf32> to vector<8x256xf32>
    %6 = arith.addf %3, %5 : vector<8x256xf32>
    %c0_5 = arith.constant 0 : index
    %c0_6 = arith.constant 0 : index
    %7 = vector.load %arg5[%c0_5, %c0_6] : memref<8x256xf32, #tpu.memory_space<vmem>>, vector<8x256xf32>
    tpu.vector_store %arg5[%c0_5, %c0_6], %6 {strides = array<i32>} : memref<8x256xf32, #tpu.memory_space<vmem>>, vector<8x256xf32>,
    return
  }
  func.func @transform_0(%arg0: i32, %arg1: i32) -> (i32, i32) {
    %c0_i32 = arith.constant 0 : i32
    %c0_i32_0 = arith.constant 0 : i32
    return %arg0, %c0_i32 : i32, i32
  }
  func.func @transform_1(%arg0: i32, %arg1: i32) -> (i32, i32) {
    %c0_i32 = arith.constant 0 : i32
    %c0_i32_0 = arith.constant 0 : i32
    return %arg0, %c0_i32 : i32, i32
  }
  func.func @transform_2(%arg0: i32, %arg1: i32) -> (i32, i32) {
    %c0_i32 = arith.constant 0 : i32
    return %arg0, %arg1 : i32, i32
  }
  func.func @transform_3(%arg0: i32, %arg1: i32) -> (i32, i32) {
    %c0_i32 = arith.constant 0 : i32
    return %arg0, %arg1 : i32, i32
  }
}

</mosaic_0001>

<llo_original>
// kernel: tpu_custom_call.1
$region0: #{tpu_custom_call.1}
  #allocation0 [shape = 'u32[]', space=smem, size = 0x4, offset = 0x4, fixed_abs, tag = 'smem constant byte address 0x4 - core index']
  #allocation1 [shape = 'u32[144,128]{1,0:T(1,128)}', space=vmem, size = 0x12000, scoped, tag = 'internal scratch']
  %s0 = inlined_call_operand.vmem [shape: f32[8,1], index: 0, kind: input, shape index: {}]
  %s1 = inlined_call_operand.vmem [shape: f32[8,1], index: 1, kind: input, shape index: {}]
  %s2 = inlined_call_operand.vmem [shape: f32[8,256], index: 2, kind: input, shape index: {}]
  %s3 = inlined_call_operand.hbm [shape: f32[8,256], index: 3, kind: output, shape index: {}]
  %s4 = sld [smem:[#allocation0]]
  $region22: #{tpu_custom_call.1} parent=0
    _
  %s6 = ssub.s32 1, %s4
  %s7 = scalar_select 0, %s6, %s4
  $region1: #{tpu_custom_call.1} parent=0
    #allocation2 [shape = 'u8[8192]{0}', space=vmem, size = 0x2000, scoped, tag = 'output window, operand 0, single buffered']
    #allocation3 [shape = 's32[1]{0}', space=sflag, size = 0x4, scoped, tag = 'scoped memory for tpu_custom_call.1']
    %8 = vsyncpa [#allocation3], 0
    // Predicated region
    $region2: #{tpu_custom_call.1} parent=1 // pred_check
      _
    $region3: #{tpu_custom_call.1} parent=1 // pred_check_branch
      %10 = sbr.rel (0) target = $region5
    $region4: #{tpu_custom_call.1} parent=1 // pred_region
      _
    $region5: #{tpu_custom_call.1} parent=1 // pred_fallthru
      _
    // Predicated region
    $region6: #{tpu_custom_call.1} parent=1 // pred_check
      _
    $region7: #{tpu_custom_call.1} parent=1 // pred_check_branch
      %12 = sbr.rel (0) target = $region9
    $region8: #{tpu_custom_call.1} parent=1 // pred_region
      _
    $region9: #{tpu_custom_call.1} parent=1 // pred_fallthru
      _
    // Predicated region
    $region10: #{tpu_custom_call.1} parent=1 // pred_check
      _
    $region11: #{tpu_custom_call.1} parent=1 // pred_check_branch
      %14 = sbr.rel (0) target = $region13
    $region12: #{tpu_custom_call.1} parent=1 // pred_region
      _
    $region13: #{tpu_custom_call.1} parent=1 // pred_fallthru
      _
    %v15 = vld [vmem:[%s2] sm:$0xff]
    %v16 = vld [vmem:[%s2 + $0x8] sm:$0xff]
    %v17 = vld [vmem:[%s0] sm:$0xff]
    %19 = vset.pattern.permute.xlu0 0
    %20 = vperm.xlu0 %19, %v17
    %v21 = vpop.permute.xlu0 %20
    %v23 = vmul.f32 %v15, %v21
    %v24 = vmul.f32 %v16, %v21
    %v25 = vld [vmem:[%s1] sm:$0xff]
    %27 = vset.pattern.permute.xlu0 0
    %28 = vperm.xlu0 %27, %v25
    %v29 = vpop.permute.xlu0 %28
    %v31 = vadd.f32 %v23, %v29
    %v32 = vadd.f32 %v24, %v29
    %33 = vst [vmem:[#allocation2] sm:$0xff] %v31
    %34 = vst [vmem:[#allocation2 + $0x8] sm:$0xff] %v32
    // Predicated region
    $region14: #{tpu_custom_call.1} parent=1 // pred_check
      _
    $region15: #{tpu_custom_call.1} parent=1 // pred_check_branch
      %36 = sbr.rel (0) target = $region17
    $region16: #{tpu_custom_call.1} parent=1 // pred_region
      %s38 = ssub.s32 256, 256
      %39 = vsyncadd [#allocation3], %s38
      %s41 = sshll.u32 [#allocation2], 4
      %s42 = int_to_ptr.vmem [resolvable:$true] %s41
      %44 = dma.vmem_to_hbm [thread:$0]  %s42, 256, %s3, [#allocation3]
    $region17: #{tpu_custom_call.1} parent=1 // pred_fallthru
      _
    // Predicated region
    $region18: #{tpu_custom_call.1} parent=1 // pred_check
      _
    $region19: #{tpu_custom_call.1} parent=1 // pred_check_branch
      %46 = sbr.rel (0) target = $region21
    $region20: #{tpu_custom_call.1} parent=1 // pred_region
      %47 = dma.done [#allocation3], 256
    $region21: #{tpu_custom_call.1} parent=1 // pred_fallthru
      _
    %48 = vsyncpa [#allocation3], 1

</llo_original>
